<compile_context>
chip_gen: v6e
topology: v6e:2x2x1
jax: 0.10.0
libtpu: 0.0.40
codegen_flags: <defaults>
</compile_context>

<pallas_src>
import functools

import jax
import jax.numpy as jnp
from jax.experimental import pallas as pl
from jax.experimental.pallas import tpu as pltpu

LANE = 128
SUBLANE = 8


# --------------------------------------------------------------------------- #
# Pooling kernels
# --------------------------------------------------------------------------- #
def _pool_full_kernel(x_ref, avg_ref, max_ref, *, inv_s):
    # x_ref  : (B, c_tile, S) block of x (native dtype)
    # avg_ref: (1, B, c_tile) f32
    # max_ref: (1, B, c_tile) f32
    x = x_ref[...].astype(jnp.float32)
    avg_ref[0] = jnp.sum(x, axis=-1) * inv_s
    max_ref[0] = jnp.max(x, axis=-1)


def _pool_tiled_kernel(x_ref, avg_ref, max_ref, *, inv_s):
    # Fallback: S is tiled; partial results accumulate directly into the
    # resident output block (same output block index across the S axis).
    j = pl.program_id(1)
    x = x_ref[...].astype(jnp.float32)          # (B, c_tile, s_tile)
    part_sum = jnp.sum(x, axis=-1)              # (B, c_tile)
    part_max = jnp.max(x, axis=-1)              # (B, c_tile)

    @pl.when(j == 0)
    def _init():
        avg_ref[0] = part_sum
        max_ref[0] = part_max

    @pl.when(j > 0)
    def _accumulate():
        avg_ref[0] = avg_ref[0] + part_sum
        max_ref[0] = jnp.maximum(max_ref[0], part_max)

    @pl.when(j == pl.num_programs(1) - 1)
    def _finalize():
        avg_ref[0] = avg_ref[0] * inv_s


# --------------------------------------------------------------------------- #
# Tile selection
# --------------------------------------------------------------------------- #
def _c_tile_candidates(C):
    cands = {C}
    for d in range(SUBLANE, C, SUBLANE):
        if C % d == 0:
            cands.add(d)
    return sorted(cands, reverse=True)          # largest first


def _select_tiles(B, C, S, dtype_bytes, budget):
    """Returns (c_tile, s_tile). s_tile == S selects the full-spatial path."""
    c_cands = _c_tile_candidates(C)

    def fits(ct, st):
        return B * ct * st * dtype_bytes <= budget

    # Path A: full-spatial blocks; prefer >= 2 C tiles (v7x megacore sharding).
    a_multi = [ct for ct in c_cands if C // ct >= 2 and fits(ct, S)]
    if a_multi:
        return a_multi[0], S
    a_any = [ct for ct in c_cands if fits(ct, S)]
    if a_any:
        return a_any[0], S

    # Path B: tile S with a multiple-of-128 divisor (keeps blocks layout-legal).
    s_cands = [st for st in range(S - S % LANE, LANE - 1, -LANE) if S % st == 0]
    if s_cands:
        pref = [ct for ct in c_cands if C // ct >= 2]
        rest = [ct for ct in c_cands if ct not in pref]
        for ct in pref + rest:
            st_ok = [st for st in s_cands if fits(ct, st)]
            if st_ok:
                return ct, st_ok[0]

    # Last resort: S has no 128-multiple divisor and even the smallest C tile
    # exceeds the budget -> take the full-S block anyway; the caller raises
    # vmem_limit_bytes.  # TODO(synk): masked-remainder S tiling for this case.
    return c_cands[-1], S


# --------------------------------------------------------------------------- #
# Forward pass
# --------------------------------------------------------------------------- #
def channel_attention(x, w_fc1, w_fc2, *, per_buffer_bytes=6 * 1024 * 1024):
    """CBAM ChannelAttention forward.

    x     : (B, C, H, W)   (f32 or bf16)
    w_fc1 : (C // ratio, C)  -- squeezed Conv2d(C, C//ratio, 1, bias=False) weight
    w_fc2 : (C, C // ratio)
    Returns (B, C, 1, 1) sigmoid attention weights (dtype of x).
    """
    B, C, H, W = x.shape
    S = H * W
    x_flat = x.reshape(B, C, S)
    dtype_bytes = jnp.dtype(x.dtype).itemsize

    c_tile, s_tile = _select_tiles(B, C, S, dtype_bytes, per_buffer_bytes)
    nc = C // c_tile
    block_bytes = B * c_tile * s_tile * dtype_bytes
    # Double-buffered input block + tiny output blocks + headroom; floor keeps
    # us no worse than defaults, cap stays below v7x's 64 MiB physical VMEM.
    vmem_limit = int(min(max(4 * block_bytes + (4 << 20), 24 << 20), 56 << 20))

    pooled_shape = jax.ShapeDtypeStruct((nc, B, c_tile), jnp.float32)

    if s_tile == S:
        grid = (nc,)
        kernel = functools.partial(_pool_full_kernel, inv_s=1.0 / float(S))
        in_specs = [pl.BlockSpec((B, c_tile, S), lambda i: (0, i, 0))]
        out_spec = pl.BlockSpec((1, B, c_tile), lambda i: (i, 0, 0))
        dim_sem = ("parallel",)
    else:
        grid = (nc, S // s_tile)
        kernel = functools.partial(_pool_tiled_kernel, inv_s=1.0 / float(S))
        in_specs = [pl.BlockSpec((B, c_tile, s_tile), lambda i, j: (0, i, j))]
        out_spec = pl.BlockSpec((1, B, c_tile), lambda i, j: (i, 0, 0))
        dim_sem = ("parallel", "arbitrary")

    avg3, max3 = pl.pallas_call(
        kernel,
        out_shape=(pooled_shape, pooled_shape),
        grid_spec=pltpu.PrefetchScalarGridSpec(
            num_scalar_prefetch=0,
            grid=grid,
            in_specs=in_specs,
            out_specs=(out_spec, out_spec),
        ),
        compiler_params=pltpu.CompilerParams(
            dimension_semantics=dim_sem,
            vmem_limit_bytes=vmem_limit),
        cost_estimate=pl.CostEstimate(
            flops=2 * B * C * S,
            transcendentals=0,
            bytes_accessed=B * C * S * dtype_bytes + 2 * nc * B * c_tile * 4),
    )(x_flat)

    # (nc, B, c_tile) -> (B, C); tiny.
    avg_p = jnp.transpose(avg3, (1, 0, 2)).reshape(B, C)
    max_p = jnp.transpose(max3, (1, 0, 2)).reshape(B, C)

    # Tiny MLP in plain JAX (negligible FLOPs/bytes; avoids a second kernel
    # launch + HBM round trip).  Stacked so fc1 is one matmul; fc2 is linear so
    # fc2(relu(fc1(avg))) + fc2(relu(fc1(max))) == fc2(h_avg + h_max).
    w1_t = w_fc1.astype(jnp.float32).T           # (C, Cr)
    w2_t = w_fc2.astype(jnp.float32).T           # (Cr, C)
    stacked = jnp.concatenate([avg_p, max_p], axis=0)        # (2B, C)
    h = jnp.maximum(stacked @ w1_t, 0.0)                     # (2B, Cr)
    logits = (h[:B] + h[B:]) @ w2_t                          # (B, C)
    att = jax.nn.sigmoid(logits)
    return att.reshape(B, C, 1, 1).astype(x.dtype)


# --------------------------------------------------------------------------- #
# Reference + tests
# --------------------------------------------------------------------------- #
def _reference(x, w_fc1, w_fc2):
    """Pure-JAX reference matching the PyTorch forward (f32 accumulation)."""
    B, C, H, W = x.shape
    xf = x.astype(jnp.float32)
    avg = jnp.mean(xf, axis=(2, 3))
    mx = jnp.max(xf, axis=(2, 3))
    w1 = w_fc1.astype(jnp.float32)
    w2 = w_fc2.astype(jnp.float32)

    def mlp(v):
        h = jnp.maximum(v @ w1.T, 0.0)
        return h @ w2.T

    out = jax.nn.sigmoid(mlp(avg) + mlp(mx))
    return out.reshape(B, C, 1, 1).astype(x.dtype)


if __name__ == "__main__":
    key = jax.random.PRNGKey(0)

    def make_case(k, B, C, H, W, dtype=jnp.float32):
        kx, k1, k2 = jax.random.split(k, 3)
        Cr = max(C // 16, 1)
        x = jax.random.normal(kx, (B, C, H, W), dtype=jnp.float32).astype(dtype)
        w_fc1 = jax.random.normal(k1, (Cr, C), dtype=jnp.float32) * (2.0 / C) ** 0.5
        w_fc2 = jax.random.normal(k2, (C, Cr), dtype=jnp.float32) * (2.0 / Cr) ** 0.5
        return x, w_fc1, w_fc2

    ka, kb, kc, kd = jax.random.split(key, 4)

    # Case 1: small shape, full-spatial path; C split into 2 tiles (megacore).
    x, wf1, wf2 = make_case(ka, 2, 32, 16, 16)
    out = jax.block_until_ready(channel_attention(x, wf1, wf2))
    assert out.shape == (2, 32, 1, 1)
    assert jnp.allclose(out, _reference(x, wf1, wf2), atol=1e-5, rtol=1e-5), \
        "case 1 mismatch vs reference"

    # Case 2: force the S-tiled fallback (accumulate-into-output) path.
    x, wf1, wf2 = make_case(kb, 2, 256, 32, 32)
    out = jax.block_until_ready(
        channel_attention(x, wf1, wf2, per_buffer_bytes=32 * 1024))
    assert jnp.allclose(out, _reference(x, wf1, wf2), atol=1e-5, rtol=1e-5), \
        "case 2 mismatch vs reference"

    # Case 3: spatial size not a multiple of 128 (typical CNN sizes) -> still
    # the full-spatial path, no special-casing needed.
    x, wf1, wf2 = make_case(kc, 2, 32, 10, 10)
    out = jax.block_until_ready(channel_attention(x, wf1, wf2))
    assert jnp.allclose(out, _reference(x, wf1, wf2), atol=1e-5, rtol=1e-5), \
        "case 3 mismatch vs reference"

    # Case 4: bf16 input DMA'd natively (half the HBM bytes), f32 accumulation.
    x, wf1, wf2 = make_case(kd, 2, 64, 7, 7, dtype=jnp.bfloat16)
    out = jax.block_until_ready(channel_attention(x, wf1, wf2))
    ref = _reference(x, wf1, wf2)
    assert jnp.allclose(out.astype(jnp.float32), ref.astype(jnp.float32),
                        atol=1e-2, rtol=1e-2), "case 4 mismatch vs reference"

    print("KERNEL_OK")
</pallas_src>

<mosaic_0001>
module attributes {stable_mosaic.version = 11 : i64} {
  func.func @_pool_full_kernel(%arg0: i32, %arg1: memref<2x16x256xf32, #tpu.memory_space<vmem>>, %arg2: memref<1x2x16xf32, #tpu.memory_space<vmem>>, %arg3: memref<1x2x16xf32, #tpu.memory_space<vmem>>) attributes {dimension_semantics = [#tpu.dimension_semantics<parallel>], iteration_bounds = array<i64: 2>, scalar_prefetch = 0 : i64, scratch_operands = 0 : i64, tpu.core_type = #tpu.core_type<tc>, window_params = [{transform_indices = @transform_0, window_bounds = array<i64: 2, 16, 256>}, {transform_indices = @transform_1, window_bounds = array<i64: 1, 2, 16>}, {transform_indices = @transform_2, window_bounds = array<i64: 1, 2, 16>}]} {
    %c0 = arith.constant 0 : index
    %c0_0 = arith.constant 0 : index
    %c0_1 = arith.constant 0 : index
    %0 = vector.load %arg1[%c0, %c0_0, %c0_1] : memref<2x16x256xf32, #tpu.memory_space<vmem>>, vector<2x16x256xf32>
    %cst = arith.constant dense<0.000000e+00> : vector<2x16xf32>
    %1 = vector.multi_reduction <add>, %0, %cst [2] : vector<2x16x256xf32> to vector<2x16xf32>
    %cst_2 = arith.constant 3.906250e-03 : f32
    %2 = vector.broadcast %cst_2 : f32 to vector<2x16xf32>
    %3 = arith.mulf %1, %2 : vector<2x16xf32>
    %c0_3 = arith.constant 0 : index
    %c0_4 = arith.constant 0 : index
    %c0_5 = arith.constant 0 : index
    %4 = vector.load %arg2[%c0_3, %c0_4, %c0_5] : memref<1x2x16xf32, #tpu.memory_space<vmem>>, vector<1x2x16xf32>
    %5 = vector.shape_cast %4 : vector<1x2x16xf32> to vector<2x16xf32>
    %6 = vector.shape_cast %3 : vector<2x16xf32> to vector<1x2x16xf32>
    tpu.vector_store %arg2[%c0_3, %c0_4, %c0_5], %6 {strides = array<i32>} : memref<1x2x16xf32, #tpu.memory_space<vmem>>, vector<1x2x16xf32>,
    %cst_6 = arith.constant dense<0xFF800000> : vector<2x16xf32>
    %7 = vector.multi_reduction <maximumf>, %0, %cst_6 [2] : vector<2x16x256xf32> to vector<2x16xf32>
    %c0_7 = arith.constant 0 : index
    %c0_8 = arith.constant 0 : index
    %c0_9 = arith.constant 0 : index
    %8 = vector.load %arg3[%c0_7, %c0_8, %c0_9] : memref<1x2x16xf32, #tpu.memory_space<vmem>>, vector<1x2x16xf32>
    %9 = vector.shape_cast %8 : vector<1x2x16xf32> to vector<2x16xf32>
    %10 = vector.shape_cast %7 : vector<2x16xf32> to vector<1x2x16xf32>
    tpu.vector_store %arg3[%c0_7, %c0_8, %c0_9], %10 {strides = array<i32>} : memref<1x2x16xf32, #tpu.memory_space<vmem>>, vector<1x2x16xf32>,
    return
  }
  func.func @transform_0(%arg0: i32) -> (i32, i32, i32) {
    %c0_i32 = arith.constant 0 : i32
    %c0_i32_0 = arith.constant 0 : i32
    %c0_i32_1 = arith.constant 0 : i32
    return %c0_i32, %arg0, %c0_i32_0 : i32, i32, i32
  }
  func.func @transform_1(%arg0: i32) -> (i32, i32, i32) {
    %c0_i32 = arith.constant 0 : i32
    %c0_i32_0 = arith.constant 0 : i32
    %c0_i32_1 = arith.constant 0 : i32
    return %arg0, %c0_i32, %c0_i32_0 : i32, i32, i32
  }
  func.func @transform_2(%arg0: i32) -> (i32, i32, i32) {
    %c0_i32 = arith.constant 0 : i32
    %c0_i32_0 = arith.constant 0 : i32
    %c0_i32_1 = arith.constant 0 : i32
    return %arg0, %c0_i32, %c0_i32_0 : i32, i32, i32
  }
}

</mosaic_0001>

<llo_original>
// kernel: tpu_custom_call.1
$region0: #{tpu_custom_call.1}
  #allocation0 [shape = 'u32[]', space=smem, size = 0x4, offset = 0x4, fixed_abs, tag = 'smem constant byte address 0x4 - core index']
  #allocation1 [shape = 'u32[144,128]{1,0:T(1,128)}', space=vmem, size = 0x12000, scoped, tag = 'internal scratch']
  #allocation8 [shape = 's32[]', space=sflag, size = 0x4, offset = 0, fixed_abs, tag = 'sflag constant byte address 0x0 - dummy sync flag']
  %s0 = inlined_call_operand.hbm [shape: f32[2,32,256], index: 0, kind: input, shape index: {}]
  %s1 = inlined_call_operand.hbm [shape: f32[2,2,16], index: 1, kind: output, shape index: {0}]
  %s2 = inlined_call_operand.hbm [shape: f32[2,2,16], index: 2, kind: output, shape index: {1}]
  %3 = xla_tuple %s1, %s2
  %s4 = sld [smem:[#allocation0]]
  $region49: #{tpu_custom_call.1} parent=0
    _
  %s6 = ssub.s32 1, %s4
  %s7 = scalar_select 0, %s6, %s4
  $region1: #{tpu_custom_call.1} parent=0
    #allocation2 [shape = 'u8[65536]{0}', space=vmem, size = 0x10000, scoped, tag = 'input window, operand 0']
    #allocation3 [shape = 's32[2]{0}', space=sflag, size = 0x8, scoped, tag = 'scoped memory for tpu_custom_call.1']
    #allocation4 [shape = 's32[2]{0}', space=sflag, size = 0x8, scoped, tag = 'scoped memory for tpu_custom_call.1']
    #allocation5 [shape = 'u8[2048]{0}', space=vmem, size = 0x800, scoped, tag = 'output window, operand 0']
    #allocation6 [shape = 'u8[2048]{0}', space=vmem, size = 0x800, scoped, tag = 'output window, operand 1']
    #allocation7 [shape = 's32[2]{0}', space=sflag, size = 0x8, scoped, tag = 'scoped memory for tpu_custom_call.1']
    %8 = vsyncpa [#allocation3], 0
    %s9 = scalar_lea.sflag [#allocation3], 1
    %10 = vsyncpa %s9, 0
    %11 = vsyncpa [#allocation4], 0
    %s12 = scalar_lea.sflag [#allocation4], 1
    %13 = vsyncpa %s12, 0
    %14 = vsyncpa [#allocation7], 0
    %s15 = scalar_lea.sflag [#allocation7], 1
    %16 = vsyncpa %s15, 0
    loop: start=0, step=1, limit=4
    $region2: #{tpu_custom_call.1} parent=1 // loop_pre_header
      _
    $region3: #{tpu_custom_call.1} parent=1 // loop_header
      %s18 = sphi 0, %s22
      %p19 = scmp.ge.s32.totalorder %s18, 4
      %s28 = sphi 0, %s30
      %s31 = sphi 0, %s28
      %s32 = sphi 0, %s31
      %s48 = sphi 0, %s32
      %s54 = sphi 0, %s56
      %s57 = sphi 0, %s54
      %s58 = sphi 0, %s57
      %s74 = sphi 0, %s58
      %s80 = sphi 0, %s82
      %s83 = sphi 0, %s80
      %s84 = sphi 0, %s83
      %s100 = sphi 0, %s84
    $region4: #{tpu_custom_call.1} parent=1 // loop_header_branch
      %21 = sbr.rel (%p19) target = $region8
    $region5: #{tpu_custom_call.1} parent=1 // loop_body
      %s23 = ssub.s32 %s18, 1
      %s24 = ssub.s32 %s18, 2
      %s25 = sadd.s32 %s18, 1
      %s26 = ssub.s32 %s18, %s25
      %p27 = scmp.eq.s32.totalorder %s26, 0
      %s29 = sadd.s32 %s28, 1
      %s30 = scalar_select %p27, %s28, %s29
      %p33 = pneg %p27
      %p34 = scmp.eq.s32.totalorder %s18, 1
      %p35 = por %p33, %p34
      %p36 = scmp.ne.s32.totalorder %s28, %s31
      %p37 = scmp.eq.s32.totalorder %s18, 0
      %p38 = por %p36, %p37
      %p39 = scmp.ne.s32.totalorder %s28, %s31
      %p40 = scmp.eq.s32.totalorder %s23, 1
      %p41 = por %p39, %p40
      %p42 = scmp.ne.s32.totalorder %s31, %s32
      %p43 = scmp.eq.s32.totalorder %s23, 0
      %p44 = por %p42, %p43
      %p45 = scmp.ne.s32.totalorder %s31, %s32
      %p46 = scmp.eq.s32.totalorder %s24, 1
      %p47 = por %p45, %p46
      %p49 = scmp.ne.s32.totalorder %s32, %s48
      %p50 = scmp.eq.s32.totalorder %s24, 0
      %p51 = por %p49, %p50
      %s52 = ssub.s32 %s18, %s25
      %p53 = scmp.eq.s32.totalorder %s52, 0
      %s55 = sadd.s32 %s54, 1
      %s56 = scalar_select %p53, %s54, %s55
      %p59 = pneg %p53
      %p60 = scmp.eq.s32.totalorder %s18, 1
      %p61 = por %p59, %p60
      %p62 = scmp.ne.s32.totalorder %s54, %s57
      %p63 = scmp.eq.s32.totalorder %s18, 0
      %p64 = por %p62, %p63
      %p65 = scmp.ne.s32.totalorder %s54, %s57
      %p66 = scmp.eq.s32.totalorder %s23, 1
      %p67 = por %p65, %p66
      %p68 = scmp.ne.s32.totalorder %s57, %s58
      %p69 = scmp.eq.s32.totalorder %s23, 0
      %p70 = por %p68, %p69
      %p71 = scmp.ne.s32.totalorder %s57, %s58
      %p72 = scmp.eq.s32.totalorder %s24, 1
      %p73 = por %p71, %p72
      %p75 = scmp.ne.s32.totalorder %s58, %s74
      %p76 = scmp.eq.s32.totalorder %s24, 0
      %p77 = por %p75, %p76
      %s78 = ssub.s32 %s18, %s25
      %p79 = scmp.eq.s32.totalorder %s78, 0
      %s81 = sadd.s32 %s80, 1
      %s82 = scalar_select %p79, %s80, %s81
      %p85 = pneg %p79
      %p86 = scmp.eq.s32.totalorder %s18, 1
      %p87 = por %p85, %p86
      %p88 = scmp.ne.s32.totalorder %s80, %s83
      %p89 = scmp.eq.s32.totalorder %s18, 0
      %p90 = por %p88, %p89
      %p91 = scmp.ne.s32.totalorder %s80, %s83
      %p92 = scmp.eq.s32.totalorder %s23, 1
      %p93 = por %p91, %p92
      %p94 = scmp.ne.s32.totalorder %s83, %s84
      %p95 = scmp.eq.s32.totalorder %s23, 0
      %p96 = por %p94, %p95
      %p97 = scmp.ne.s32.totalorder %s83, %s84
      %p98 = scmp.eq.s32.totalorder %s24, 1
      %p99 = por %p97, %p98
      %p101 = scmp.ne.s32.totalorder %s84, %s100
      %p102 = scmp.eq.s32.totalorder %s24, 0
      %p103 = por %p101, %p102
      %p104 = scmp.le.s32.totalorder 1, %s18
      %p105 = scmp.lt.s32.totalorder %s18, 3
      %p106 = pnand %p104, %p105
      %p107 = pneg %p106
      // Predicated region
      $region9: #{tpu_custom_call.1} parent=5 // pred_check
        _
      $region10: #{tpu_custom_call.1} parent=5 // pred_check_branch
        %109 = sbr.rel (%p106) target = $region12
      $region11: #{tpu_custom_call.1} parent=5 // pred_region
        %s110 = ssub.s32 %s18, 1
      $region12: #{tpu_custom_call.1} parent=5 // pred_fallthru
        _
      %p111 = scmp.lt.s32.totalorder %s18, 2
      // Predicated region
      $region13: #{tpu_custom_call.1} parent=5 // pred_check
        %p112 = pneg %p111
      $region14: #{tpu_custom_call.1} parent=5 // pred_check_branch
        %114 = sbr.rel (%p112) target = $region16
      $region15: #{tpu_custom_call.1} parent=5 // pred_region
        // Predicated region
        $region17: #{tpu_custom_call.1} parent=15 // pred_check
          %p115 = pneg %p38
        $region18: #{tpu_custom_call.1} parent=15 // pred_check_branch
          %117 = sbr.rel (%p115) target = $region20
        $region19: #{tpu_custom_call.1} parent=15 // pred_region
          #allocation9 [shape = 'u32[6]{0}', space=smem, size = 0x18, scoped, tag = 'DMA stride descriptor']
          %s118 = sand.u32 %s28, 1
          %s119 = scalar_lea.sflag [#allocation3], %s118
          %s120 = sand.u32 %s28, 1
          %s121 = smul.addr %s120, 64
          %s122 = scalar_lea.vmem [#allocation2], %s121
          %s123 = smul.u32 2, %s18
          %s125 = ssub.s32 1024, 1024
          %126 = vsyncadd %s119, %s125
          %s127 = smul.addr %s123, 2
          %s128 = smul.addr %s127, 128
          %s129 = scalar_lea.hbm %s0, %s128
          %s131 = sshll.u32 1, 14
          %s132 = sxor.u32 4294967295, %s131
          %s134 = sld [smem:[#allocation0]]
          %s135 = sadd.s32 2, %s134
          %s137 = sshll.u32 7, 26
          %s138 = sxor.u32 4294967295, %s137
          %s139 = sand.u32 0, %s138
          %s140 = sshll.u32 %s135, 26
          %s141 = sor.u32 %s139, %s140
          %s142 = sshll.u32 %s122, 4
          %s143 = int_to_ptr.vmem [resolvable:$true] %s142
          %149 = sst [smem:[#allocation9]] 1024
          %s150 = scalar_lea.smem [#allocation9], 1
          %151 = sst [smem:[%s150]] 512
          %s152 = scalar_lea.smem [#allocation9], 2
          %153 = sst [smem:[%s152]] 2
          %s154 = scalar_lea.smem [#allocation9], 3
          %155 = sst [smem:[%s154]] 256
          %s156 = scalar_lea.smem [#allocation9], 4
          %157 = sst [smem:[%s156]] 256
          %s158 = scalar_lea.smem [#allocation9], 5
          %159 = sst [smem:[%s158]] 16
          %161 = dma.general %s129, 1024, %s143, %s119, 131072, [#allocation9], %s141, 0
        $region20: #{tpu_custom_call.1} parent=15 // pred_fallthru
          _
      $region16: #{tpu_custom_call.1} parent=5 // pred_fallthru
        _
      %p162 = scmp.le.s32.totalorder 1, %s18
      %p163 = scmp.lt.s32.totalorder %s18, 3
      %p164 = pnand %p162, %p163
      %p165 = pneg %p164
      // Predicated region
      $region21: #{tpu_custom_call.1} parent=5 // pred_check
        _
      $region22: #{tpu_custom_call.1} parent=5 // pred_check_branch
        %167 = sbr.rel (%p164) target = $region24
      $region23: #{tpu_custom_call.1} parent=5 // pred_region
        %s168 = ssub.s32 %s18, 1
        %s169 = sand.u32 %s31, 1
        %s170 = scalar_lea.sflag [#allocation3], %s169
        %s171 = sand.u32 %s31, 1
        %s172 = smul.addr %s171, 64
        %s173 = scalar_lea.vmem [#allocation2], %s172
        // Predicated region
        $region25: #{tpu_custom_call.1} parent=23 // pred_check
          %p174 = pneg %p44
        $region26: #{tpu_custom_call.1} parent=23 // pred_check_branch
          %176 = sbr.rel (%p174) target = $region28
        $region27: #{tpu_custom_call.1} parent=23 // pred_region
          %177 = dma.done %s170, 1024
        $region28: #{tpu_custom_call.1} parent=23 // pred_fallthru
          _
        %s178 = sand.u32 %s31, 1
        %s179 = scalar_lea.sflag [#allocation3], %s178
        %s180 = sand.u32 %s31, 1
        %s181 = smul.addr %s180, 64
        %s182 = scalar_lea.vmem [#allocation2], %s181
        %p183 = pneg %p44
        %p184 = pneg %p41
        %p185 = pneg %p70
        %p186 = pneg %p67
        %s187 = sand.u32 %s57, 1
        %s188 = scalar_lea.sflag [#allocation4], %s187
        %s189 = sand.u32 %s57, 1
        %s190 = smul.addr %s189, 2
        %s191 = scalar_lea.vmem [#allocation5], %s190
        %p192 = pneg %p96
        %p193 = pneg %p93
        %s194 = sand.u32 %s83, 1
        %s195 = scalar_lea.sflag [#allocation7], %s194
        %s196 = sand.u32 %s83, 1
        %s197 = smul.addr %s196, 2
        %s198 = scalar_lea.vmem [#allocation6], %s197
        %s199 = smul.u32 2, %s23
        %v200 = vld [vmem:[%s173] sm:$0xff]
        %v201 = vld [vmem:[%s173 + $0x8] sm:$0xff]
        %v202 = vld [vmem:[%s173 + $0x10] sm:$0xff]
        %v203 = vld [vmem:[%s173 + $0x18] sm:$0xff]
        %v204 = vld [vmem:[%s173 + $0x20] sm:$0xff]
        %v205 = vld [vmem:[%s173 + $0x28] sm:$0xff]
        %v206 = vld [vmem:[%s173 + $0x30] sm:$0xff]
        %v207 = vld [vmem:[%s173 + $0x38] sm:$0xff]
        %v208 = vadd.f32 %v200, %v201
        %209 = vadd.xlane.f32.xlu0 %v208
        %v210 = vpop.xlane.xlu0 %209
        %v211 = vadd.f32 %v202, %v203
        %212 = vadd.xlane.f32.xlu0 %v211
        %v213 = vpop.xlane.xlu0 %212
        %v214 = vadd.f32 %v204, %v205
        %215 = vadd.xlane.f32.xlu0 %v214
        %v216 = vpop.xlane.xlu0 %215
        %v217 = vadd.f32 %v206, %v207
        %218 = vadd.xlane.f32.xlu0 %v217
        %v219 = vpop.xlane.xlu0 %218
        %v220 = vmul.f32 %v210, 0.00390625
        %v221 = vmul.f32 %v213, 0.00390625
        %v222 = vmul.f32 %v216, 0.00390625
        %v223 = vmul.f32 %v219, 0.00390625
        %v228 = vlaneseq
        %v229 = vand.u32 %v228, 127
        %v230 = vlaneseq
        %v231 = vshrl.u32 %v230, 7
        %v232 = vsub.s32 %v229, %v231
        %v233 = vrot.slane %v220, %v232
        %v234 = vadd.s32 %v229, 4294967288
        %v235 = vlaneseq
        %v236 = vshrl.u32 %v235, 7
        %v237 = vsub.s32 %v234, %v236
        %v238 = vrot.slane %v221, %v237
        %vm239 = vcmask 130112
        %v240 = vsel %vm239, %v238, %v233
        %v241 = vlaneseq
        %v242 = vshrl.u32 %v241, 7
        %v243 = vsub.s32 %v229, %v242
        %v244 = vrot.slane %v222, %v243
        %v245 = vlaneseq
        %v246 = vshrl.u32 %v245, 7
        %v247 = vsub.s32 %v234, %v246
        %v248 = vrot.slane %v223, %v247
        %v249 = vsel %vm239, %v248, %v244
        %vm250 = vcmask 1041409
        %v251 = vsel %vm250, %v249, %v240
        %vm253 = vcmask 123904
        %254 = vst.msk [vmem:[%s191] sm:$0x3] %vm253, %v251
        %v255 = vmax.f32 %v200, %v201
        %256 = vmax.xlane.f32.xlu0 %v255
        %v257 = vpop.xlane.xlu0 %256
        %v258 = vmax.f32 %v202, %v203
        %259 = vmax.xlane.f32.xlu0 %v258
        %v260 = vpop.xlane.xlu0 %259
        %v261 = vmax.f32 %v204, %v205
        %262 = vmax.xlane.f32.xlu0 %v261
        %v263 = vpop.xlane.xlu0 %262
        %v264 = vmax.f32 %v206, %v207
        %265 = vmax.xlane.f32.xlu0 %v264
        %v266 = vpop.xlane.xlu0 %265
        %v271 = vlaneseq
        %v272 = vshrl.u32 %v271, 7
        %v273 = vsub.s32 %v229, %v272
        %v274 = vrot.slane %v257, %v273
        %v275 = vlaneseq
        %v276 = vshrl.u32 %v275, 7
        %v277 = vsub.s32 %v234, %v276
        %v278 = vrot.slane %v260, %v277
        %v279 = vsel %vm239, %v278, %v274
        %v280 = vlaneseq
        %v281 = vshrl.u32 %v280, 7
        %v282 = vsub.s32 %v229, %v281
        %v283 = vrot.slane %v263, %v282
        %v284 = vlaneseq
        %v285 = vshrl.u32 %v284, 7
        %v286 = vsub.s32 %v234, %v285
        %v287 = vrot.slane %v266, %v286
        %v288 = vsel %vm239, %v287, %v283
        %v289 = vsel %vm250, %v288, %v279
        %291 = vst.msk [vmem:[%s198] sm:$0x3] %vm253, %v289
        %s292 = sand.u32 %s57, 1
        %s293 = scalar_lea.sflag [#allocation4], %s292
        %s294 = sand.u32 %s57, 1
        %s295 = smul.addr %s294, 2
        %s296 = scalar_lea.vmem [#allocation5], %s295
        %s297 = sand.u32 %s83, 1
        %s298 = scalar_lea.sflag [#allocation7], %s297
        %s299 = sand.u32 %s83, 1
        %s300 = smul.addr %s299, 2
        %s301 = scalar_lea.vmem [#allocation6], %s300
        // Predicated region
        $region29: #{tpu_custom_call.1} parent=23 // pred_check
          %p302 = pneg %p67
        $region30: #{tpu_custom_call.1} parent=23 // pred_check_branch
          %304 = sbr.rel (%p302) target = $region32
        $region31: #{tpu_custom_call.1} parent=23 // pred_region
          %s306 = ssub.s32 32, 32
          %307 = vsyncadd %s293, %s306
          %s308 = smul.addr %s23, 32
          %s309 = scalar_lea.hbm %s1, %s308
          %s311 = sshll.u32 %s296, 4
          %s312 = int_to_ptr.vmem [resolvable:$true] %s311
          %314 = dma.vmem_to_hbm [thread:$0]  %s312, 32, %s309, %s293
        $region32: #{tpu_custom_call.1} parent=23 // pred_fallthru
          _
        // Predicated region
        $region33: #{tpu_custom_call.1} parent=23 // pred_check
          %p315 = pneg %p93
        $region34: #{tpu_custom_call.1} parent=23 // pred_check_branch
          %317 = sbr.rel (%p315) target = $region36
        $region35: #{tpu_custom_call.1} parent=23 // pred_region
          %s319 = ssub.s32 32, 32
          %320 = vsyncadd %s298, %s319
          %s321 = smul.addr %s23, 32
          %s322 = scalar_lea.hbm %s2, %s321
          %s324 = sshll.u32 %s301, 4
          %s325 = int_to_ptr.vmem [resolvable:$true] %s324
          %327 = dma.vmem_to_hbm [thread:$0]  %s325, 32, %s322, %s298
        $region36: #{tpu_custom_call.1} parent=23 // pred_fallthru
          _
      $region24: #{tpu_custom_call.1} parent=5 // pred_fallthru
        _
      %p328 = scmp.le.s32.totalorder 2, %s18
      // Predicated region
      $region37: #{tpu_custom_call.1} parent=5 // pred_check
        %p329 = pneg %p328
      $region38: #{tpu_custom_call.1} parent=5 // pred_check_branch
        %331 = sbr.rel (%p329) target = $region40
      $region39: #{tpu_custom_call.1} parent=5 // pred_region
        %s332 = ssub.s32 %s18, 2
        // Predicated region
        $region41: #{tpu_custom_call.1} parent=39 // pred_check
          %p333 = pneg %p73
        $region42: #{tpu_custom_call.1} parent=39 // pred_check_branch
          %335 = sbr.rel (%p333) target = $region44
        $region43: #{tpu_custom_call.1} parent=39 // pred_region
          %s336 = sand.u32 %s58, 1
          %s337 = scalar_lea.sflag [#allocation4], %s336
          %s338 = sand.u32 %s58, 1
          %s339 = smul.addr %s338, 2
          %s340 = scalar_lea.vmem [#allocation5], %s339
          %341 = dma.done %s337, 32
        $region44: #{tpu_custom_call.1} parent=39 // pred_fallthru
          _
        // Predicated region
        $region45: #{tpu_custom_call.1} parent=39 // pred_check
          %p342 = pneg %p99
        $region46: #{tpu_custom_call.1} parent=39 // pred_check_branch
          %344 = sbr.rel (%p342) target = $region48
        $region47: #{tpu_custom_call.1} parent=39 // pred_region
          %s345 = sand.u32 %s84, 1
          %s346 = scalar_lea.sflag [#allocation7], %s345
          %s347 = sand.u32 %s84, 1
          %s348 = smul.addr %s347, 2
          %s349 = scalar_lea.vmem [#allocation6], %s348
          %350 = dma.done %s346, 32
        $region48: #{tpu_custom_call.1} parent=39 // pred_fallthru
          _
      $region40: #{tpu_custom_call.1} parent=5 // pred_fallthru
        _
    $region6: #{tpu_custom_call.1} parent=1 // loop_footer
      %s22 = sadd.s32 1, %s18
    $region7: #{tpu_custom_call.1} parent=1 // loop_footer_branch
      %17 = sbr.rel target = $region3
    $region8: #{tpu_custom_call.1} parent=1 // loop_exit
      _
    %351 = vsyncpa [#allocation3], 1
    %s352 = scalar_lea.sflag [#allocation3], 1
    %353 = vsyncpa %s352, 1
    %354 = vsyncpa [#allocation4], 1
    %s355 = scalar_lea.sflag [#allocation4], 1
    %356 = vsyncpa %s355, 1
    %357 = vsyncpa [#allocation7], 1
    %s358 = scalar_lea.sflag [#allocation7], 1
    %359 = vsyncpa %s358, 1

</llo_original>
